<compile_context>
chip_gen: v5e
topology: v5e:2x2
jax: 0.10.0
libtpu: 0.0.40
codegen_flags: <defaults>
</compile_context>

<pallas_src>
import jax
import jax.numpy as jnp
from jax.experimental import pallas as pl
from jax.experimental.pallas import tpu as pltpu


def _fusion_kernel(w_ref, x_ref, o_ref):
    # w_ref: SMEM (F,) float32, already scaled by 1/F
    # x_ref: VMEM (F, TR, L)
    # o_ref: VMEM (TR, L)
    f = x_ref.shape[0]
    acc = x_ref[0].astype(jnp.float32) * w_ref[0]
    for i in range(1, f):  # F is small and static -> unrolled VPU adds/muls
        acc = acc + x_ref[i].astype(jnp.float32) * w_ref[i]
    o_ref[...] = acc.astype(o_ref.dtype)


def _round_down(v, m):
    return (v // m) * m


def modal_fusion(x, w, *,
                 target_block_bytes=4 * 1024 * 1024,   # per input buffer
                 vmem_limit_bytes=48 * 1024 * 1024):   # safe on v5e/v6e/v7x
    """x: (F, *dims), w: (F,)  ->  mean_i(x[i] * w[i]) with shape dims."""
    F = int(x.shape[0])
    out_nd_shape = x.shape[1:]
    N = 1
    for d in out_nd_shape:
        N *= int(d)

    itemsize = x.dtype.itemsize
    # dtype-aware sublane multiple: f32 -> 8, bf16 -> 16, int8/fp8 -> 32
    sub = {4: 8, 2: 16, 1: 32}.get(itemsize, 8)

    # ---- lane-dense factorization N = R * L with L a multiple of 128 -------
    L = 0
    cand = 128
    while cand <= min(N, 1024):
        if N % cand == 0:
            L = cand
        cand += 128
    if L == 0:
        # No multiple of 128 divides N: fall back to using the trailing dim as
        # the lane axis (block == full dim, legal; relies on masked stores).
        # TODO(synk): pad-free lane-dense repack for pathological N (e.g. prime).
        L = int(out_nd_shape[-1]) if len(out_nd_shape) > 0 else N
        R = N // L
    else:
        R = N // L

    x2 = x.reshape(F, R, L)  # contiguous reshape: no HBM data movement

    # ---- row tile sized against the VMEM budget -----------------------------
    bytes_per_row = F * L * itemsize
    row_tile = max(sub, _round_down(target_block_bytes // max(bytes_per_row, 1), sub))
    # Keep at least ~8 grid steps when the problem is large enough (pipeline
    # overlap + feed both TensorCores on v7x via the "parallel" axis).
    if R >= 8 * sub:
        row_tile = min(row_tile, max(sub, _round_down(pl.cdiv(R, 8), sub)))
    if row_tile >= R:
        row_tile = R  # single block along rows (block == full dim: legal)
    grid_r = pl.cdiv(R, row_tile)

    # Fold the 1/F of the mean into the scalar weights (SMEM).
    w_scaled = (w.astype(jnp.float32) / jnp.float32(F))

    out2 = pl.pallas_call(
        _fusion_kernel,
        out_shape=jax.ShapeDtypeStruct((R, L), x.dtype),
        grid_spec=pltpu.PrefetchScalarGridSpec(
            num_scalar_prefetch=0,
            grid=(grid_r,),
            in_specs=[
                pl.BlockSpec(memory_space=pltpu.SMEM),               # w/F
                pl.BlockSpec((F, row_tile, L), lambda i: (0, i, 0)),  # x slab
            ],
            out_specs=pl.BlockSpec((row_tile, L), lambda i: (i, 0)),
        ),
        compiler_params=pltpu.CompilerParams(
            dimension_semantics=("parallel",),
            vmem_limit_bytes=vmem_limit_bytes),
        cost_estimate=pl.CostEstimate(
            flops=2 * F * N,
            transcendentals=0,
            bytes_accessed=(F + 1) * N * itemsize + F * 4),
    )(w_scaled, x2)

    return out2.reshape(out_nd_shape)


if __name__ == "__main__":
    numfeas = 4
    B, C, H, W = 2, 4, 16, 16

    key = jax.random.PRNGKey(0)
    x = jax.random.normal(key, (numfeas, B, C, H, W), dtype=jnp.float32)
    # nn.Parameter(torch.ones(numfeas)) in __init__
    w = jnp.ones((numfeas,), dtype=jnp.float32)

    out = modal_fusion(x, w)
    out = jax.block_until_ready(out)

    # reference: mean over modality axis of x[i] * w[i]
    ref = jnp.mean(x * w[:, None, None, None, None], axis=0)
    assert out.shape == (B, C, H, W)
    assert jnp.allclose(out, ref, atol=1e-5, rtol=1e-5)

    print("KERNEL_OK")
</pallas_src>

<mosaic_0001>
module attributes {stable_mosaic.version = 11 : i64} {
  func.func @_fusion_kernel(%arg0: i32, %arg1: memref<4xf32, #tpu.memory_space<smem>>, %arg2: memref<4x2x1024xf32, #tpu.memory_space<vmem>>, %arg3: memref<2x1024xf32, #tpu.memory_space<vmem>>) attributes {dimension_semantics = [#tpu.dimension_semantics<parallel>], iteration_bounds = array<i64: 1>, scalar_prefetch = 0 : i64, scratch_operands = 0 : i64, tpu.core_type = #tpu.core_type<tc>, window_params = [{transform_indices = @transform_0, window_bounds = array<i64: 4>}, {transform_indices = @transform_1, window_bounds = array<i64: 4, 2, 1024>}, {transform_indices = @transform_2, window_bounds = array<i64: 2, 1024>}]} {
    %c0 = arith.constant 0 : index
    %c0_0 = arith.constant 0 : index
    %c0_1 = arith.constant 0 : index
    %0 = vector.load %arg2[%c0, %c0_0, %c0_1] : memref<4x2x1024xf32, #tpu.memory_space<vmem>>, vector<1x2x1024xf32>
    %1 = vector.shape_cast %0 : vector<1x2x1024xf32> to vector<2x1024xf32>
    %c0_2 = arith.constant 0 : index
    %2 = memref.load %arg1[%c0_2] : memref<4xf32, #tpu.memory_space<smem>>
    %3 = vector.broadcast %2 : f32 to vector<2x1024xf32>
    %4 = arith.mulf %1, %3 : vector<2x1024xf32>
    %c1 = arith.constant 1 : index
    %c0_3 = arith.constant 0 : index
    %c0_4 = arith.constant 0 : index
    %5 = vector.load %arg2[%c1, %c0_3, %c0_4] : memref<4x2x1024xf32, #tpu.memory_space<vmem>>, vector<1x2x1024xf32>
    %6 = vector.shape_cast %5 : vector<1x2x1024xf32> to vector<2x1024xf32>
    %c1_5 = arith.constant 1 : index
    %7 = memref.load %arg1[%c1_5] : memref<4xf32, #tpu.memory_space<smem>>
    %8 = vector.broadcast %7 : f32 to vector<2x1024xf32>
    %9 = arith.mulf %6, %8 : vector<2x1024xf32>
    %10 = arith.addf %4, %9 : vector<2x1024xf32>
    %c2 = arith.constant 2 : index
    %c0_6 = arith.constant 0 : index
    %c0_7 = arith.constant 0 : index
    %11 = vector.load %arg2[%c2, %c0_6, %c0_7] : memref<4x2x1024xf32, #tpu.memory_space<vmem>>, vector<1x2x1024xf32>
    %12 = vector.shape_cast %11 : vector<1x2x1024xf32> to vector<2x1024xf32>
    %c2_8 = arith.constant 2 : index
    %13 = memref.load %arg1[%c2_8] : memref<4xf32, #tpu.memory_space<smem>>
    %14 = vector.broadcast %13 : f32 to vector<2x1024xf32>
    %15 = arith.mulf %12, %14 : vector<2x1024xf32>
    %16 = arith.addf %10, %15 : vector<2x1024xf32>
    %c3 = arith.constant 3 : index
    %c0_9 = arith.constant 0 : index
    %c0_10 = arith.constant 0 : index
    %17 = vector.load %arg2[%c3, %c0_9, %c0_10] : memref<4x2x1024xf32, #tpu.memory_space<vmem>>, vector<1x2x1024xf32>
    %18 = vector.shape_cast %17 : vector<1x2x1024xf32> to vector<2x1024xf32>
    %c3_11 = arith.constant 3 : index
    %19 = memref.load %arg1[%c3_11] : memref<4xf32, #tpu.memory_space<smem>>
    %20 = vector.broadcast %19 : f32 to vector<2x1024xf32>
    %21 = arith.mulf %18, %20 : vector<2x1024xf32>
    %22 = arith.addf %16, %21 : vector<2x1024xf32>
    %c0_12 = arith.constant 0 : index
    %c0_13 = arith.constant 0 : index
    %23 = vector.load %arg3[%c0_12, %c0_13] : memref<2x1024xf32, #tpu.memory_space<vmem>>, vector<2x1024xf32>
    tpu.vector_store %arg3[%c0_12, %c0_13], %22 {strides = array<i32>} : memref<2x1024xf32, #tpu.memory_space<vmem>>, vector<2x1024xf32>,
    return
  }
  func.func @transform_0(%arg0: i32) -> i32 {
    %c0_i32 = arith.constant 0 : i32
    %c0_i32_0 = arith.constant 0 : i32
    return %c0_i32 : i32
  }
  func.func @transform_1(%arg0: i32) -> (i32, i32, i32) {
    %c0_i32 = arith.constant 0 : i32
    %c0_i32_0 = arith.constant 0 : i32
    %c0_i32_1 = arith.constant 0 : i32
    return %c0_i32, %arg0, %c0_i32_0 : i32, i32, i32
  }
  func.func @transform_2(%arg0: i32) -> (i32, i32) {
    %c0_i32 = arith.constant 0 : i32
    %c0_i32_0 = arith.constant 0 : i32
    return %arg0, %c0_i32 : i32, i32
  }
}

</mosaic_0001>

<llo_original>
// kernel: tpu_custom_call.1
$region0: #{tpu_custom_call.1}
  #allocation0 [shape = 'u32[]', space=smem, size = 0x4, offset = 0x4, fixed_abs, tag = 'smem constant byte address 0x4 - core index']
  #allocation1 [shape = 'u32[72,128]{1,0:T(1,128)}', space=vmem, size = 0x9000, scoped, tag = 'internal scratch']
  %s0 = inlined_call_operand.hbm [shape: f32[4], index: 0, kind: input, shape index: {}]
  %s1 = inlined_call_operand.hbm [shape: f32[4,2,1024], index: 1, kind: input, shape index: {}]
  %s2 = inlined_call_operand.hbm [shape: f32[2,1024], index: 2, kind: output, shape index: {}]
  %s3 = sld [smem:[#allocation0]]
  $region26: #{tpu_custom_call.1} parent=0
    _
  %s5 = ssub.s32 1, %s3
  %s6 = scalar_select 0, %s5, %s3
  $region1: #{tpu_custom_call.1} parent=0
    #allocation2 [shape = 'u8[512]{0}', space=smem, size = 0x200, scoped, tag = 'input window, operand 0, single buffered']
    #allocation3 [shape = 's32[1]{0}', space=sflag, size = 0x4, scoped, tag = 'scoped memory for tpu_custom_call.1']
    #allocation4 [shape = 's32[1]{0}', space=sflag, size = 0x4, scoped, tag = 'scoped memory for tpu_custom_call.1']
    #allocation5 [shape = 's32[1]{0}', space=sflag, size = 0x4, scoped, tag = 'scoped memory for tpu_custom_call.1']
    #allocation6 [shape = 'u8[32768]{0}', space=vmem, size = 0x8000, scoped, tag = 'input window, operand 1, single buffered']
    #allocation7 [shape = 'u8[8192]{0}', space=vmem, size = 0x2000, scoped, tag = 'output window, operand 0, single buffered']
    %7 = vsyncpa [#allocation5], 0
    %8 = vsyncpa [#allocation3], 0
    %9 = vsyncpa [#allocation4], 0
    // Predicated region
    $region2: #{tpu_custom_call.1} parent=1 // pred_check
      _
    $region3: #{tpu_custom_call.1} parent=1 // pred_check_branch
      %11 = sbr.rel (0) target = $region5
    $region4: #{tpu_custom_call.1} parent=1 // pred_region
      %13 = vsyncadd [#allocation5], 0
      %s15 = sshll.u32 %s0, 4
      %s16 = int_to_ptr.hbm [resolvable:$true] %s15
      %18 = dma.hbm_to_smem %s16, 16, [#allocation2], [#allocation5]
    $region5: #{tpu_custom_call.1} parent=1 // pred_fallthru
      _
    // Predicated region
    $region6: #{tpu_custom_call.1} parent=1 // pred_check
      _
    $region7: #{tpu_custom_call.1} parent=1 // pred_check_branch
      %20 = sbr.rel (0) target = $region9
    $region8: #{tpu_custom_call.1} parent=1 // pred_region
      %22 = vsyncadd [#allocation3], 0
      %s23 = sshll.u32 %s1, 4
      %s24 = int_to_ptr.hbm [resolvable:$true] %s23
      %s25 = sshll.u32 [#allocation6], 4
      %s26 = int_to_ptr.vmem [resolvable:$true] %s25
      %31 = dma.hbm_to_vmem [thread:$0]  %s24, 1024, %s26, [#allocation3], 256, 256, 16
    $region9: #{tpu_custom_call.1} parent=1 // pred_fallthru
      _
    // Predicated region
    $region10: #{tpu_custom_call.1} parent=1 // pred_check
      _
    $region11: #{tpu_custom_call.1} parent=1 // pred_check_branch
      %33 = sbr.rel (0) target = $region13
    $region12: #{tpu_custom_call.1} parent=1 // pred_region
      %35 = dma.done [#allocation5], 16
    $region13: #{tpu_custom_call.1} parent=1 // pred_fallthru
      _
    // Predicated region
    $region14: #{tpu_custom_call.1} parent=1 // pred_check
      _
    $region15: #{tpu_custom_call.1} parent=1 // pred_check_branch
      %37 = sbr.rel (0) target = $region17
    $region16: #{tpu_custom_call.1} parent=1 // pred_region
      %39 = dma.done [#allocation3], 1024
    $region17: #{tpu_custom_call.1} parent=1 // pred_fallthru
      _
    %40 = sfence
    %v41 = vld [vmem:[#allocation6] sm:$0xff]
    %v42 = vld [vmem:[#allocation6 + $0x8] sm:$0xff]
    %s43 = sld [smem:[#allocation2]]
    %v44 = vstv %s43
    %v45 = vmul.f32 %v41, %v44
    %v46 = vmul.f32 %v42, %v44
    %s47 = scalar_lea.vmem [#allocation6], 16
    %v48 = vld [vmem:[%s47] sm:$0xff]
    %v49 = vld [vmem:[%s47 + $0x8] sm:$0xff]
    %s50 = sld [smem:[#allocation2 + $0x1]]
    %v51 = vstv %s50
    %v52 = vmul.f32 %v48, %v51
    %v53 = vmul.f32 %v49, %v51
    %v54 = vadd.f32 %v45, %v52
    %v55 = vadd.f32 %v46, %v53
    %s56 = scalar_lea.vmem [#allocation6], 32
    %v57 = vld [vmem:[%s56] sm:$0xff]
    %v58 = vld [vmem:[%s56 + $0x8] sm:$0xff]
    %s59 = sld [smem:[#allocation2 + $0x2]]
    %v60 = vstv %s59
    %v61 = vmul.f32 %v57, %v60
    %v62 = vmul.f32 %v58, %v60
    %v63 = vadd.f32 %v54, %v61
    %v64 = vadd.f32 %v55, %v62
    %s65 = scalar_lea.vmem [#allocation6], 48
    %v66 = vld [vmem:[%s65] sm:$0xff]
    %v67 = vld [vmem:[%s65 + $0x8] sm:$0xff]
    %s68 = sld [smem:[#allocation2 + $0x3]]
    %v69 = vstv %s68
    %v70 = vmul.f32 %v66, %v69
    %v71 = vmul.f32 %v67, %v69
    %v72 = vadd.f32 %v63, %v70
    %v73 = vadd.f32 %v64, %v71
    %74 = vst [vmem:[#allocation7] sm:$0xff] %v72
    %75 = vst [vmem:[#allocation7 + $0x8] sm:$0xff] %v73
    // Predicated region
    $region18: #{tpu_custom_call.1} parent=1 // pred_check
      _
    $region19: #{tpu_custom_call.1} parent=1 // pred_check_branch
      %77 = sbr.rel (0) target = $region21
    $region20: #{tpu_custom_call.1} parent=1 // pred_region
      %79 = vsyncadd [#allocation4], 0
      %s81 = sshll.u32 [#allocation7], 4
      %s82 = int_to_ptr.vmem [resolvable:$true] %s81
      %s83 = sshll.u32 %s2, 4
      %s84 = int_to_ptr.hbm [resolvable:$true] %s83
      %86 = dma.vmem_to_hbm [thread:$0]  %s82, 256, %s84, [#allocation4]
    $region21: #{tpu_custom_call.1} parent=1 // pred_fallthru
      _
    // Predicated region
    $region22: #{tpu_custom_call.1} parent=1 // pred_check
      _
    $region23: #{tpu_custom_call.1} parent=1 // pred_check_branch
      %88 = sbr.rel (0) target = $region25
    $region24: #{tpu_custom_call.1} parent=1 // pred_region
      %90 = dma.done [#allocation4], 256
    $region25: #{tpu_custom_call.1} parent=1 // pred_fallthru
      _
    %91 = vsyncpa [#allocation3], 1
    %92 = vsyncpa [#allocation4], 1
    %93 = vsyncpa [#allocation5], 1

</llo_original>
